<compile_context>
chip_gen: v7x
topology: tpu7x:2x2x1
jax: 0.10.0
libtpu: 0.0.40
codegen_flags: <defaults>
</compile_context>

<pallas_src>
import functools
import math

import jax
import jax.numpy as jnp
from jax import lax
from jax.experimental import pallas as pl
from jax.experimental.pallas import tpu as pltpu


def _linear_kernel_single_k(x_ref, w_ref, b_ref, o_ref):
    # x_ref: (tm, K)   w_ref: (tn, K)   b_ref: (1, tn)   o_ref: (tm, tn)
    acc = lax.dot_general(
        x_ref[...], w_ref[...],
        dimension_numbers=(((1,), (1,)), ((), ())),
        preferred_element_type=jnp.float32,
    )
    o_ref[...] = (acc + b_ref[...].astype(jnp.float32)).astype(o_ref.dtype)


def _linear_kernel_multi_k(x_ref, w_ref, b_ref, o_ref, acc_ref):
    # x_ref: (tm, tk)  w_ref: (tn, tk)  b_ref: (1, tn)  o_ref/acc_ref: (tm, tn)
    k = pl.program_id(2)

    @pl.when(k == 0)
    def _():
        # Fold the bias into the accumulator init (saves an add + bias read at
        # the finalize step).
        acc_ref[...] = jnp.broadcast_to(
            b_ref[...].astype(jnp.float32), acc_ref.shape)

    acc_ref[...] += lax.dot_general(
        x_ref[...], w_ref[...],
        dimension_numbers=(((1,), (1,)), ((), ())),
        preferred_element_type=jnp.float32,
    )

    @pl.when(k == pl.num_programs(2) - 1)
    def _():
        o_ref[...] = acc_ref[...].astype(o_ref.dtype)


def _pick_tile(dim, target, align):
    """Full dim if it already fits the target; otherwise the largest multiple
    of `align` <= target that divides `dim`; fall back to the full dim."""
    if dim <= target:
        return dim
    t = (target // align) * align
    while t >= align:
        if dim % t == 0:
            return t
        t -= align
    # TODO(synk): if a dim has no 128-aligned divisor (e.g. prime-ish d_out),
    # this falls back to the full dim; add ragged N tiling if that ever blows
    # the VMEM budget in practice.
    return dim


def linear_projector(x, weight, bias, *,
                     tm=512, tn=1024, tk=512,
                     vmem_limit_bytes=48 * 1024 * 1024,
                     compute_dtype=None):
    """Pallas equivalent of y = x @ weight.T + bias (PyTorch nn.Linear).

    x:      [..., d_in]
    weight: [d_out, d_in]   (PyTorch convention; NOT transposed in the wrapper)
    bias:   [d_out]
    """
    d_out, d_in = weight.shape
    orig_shape = x.shape
    out_dtype = x.dtype

    m = math.prod(orig_shape[:-1]) if len(orig_shape) > 1 else 1
    x2d = x.reshape(m, d_in)
    b2d = bias.reshape(1, d_out)

    # Optional reduced-precision operands (accumulation stays f32 in-kernel).
    if compute_dtype is not None:
        x2d = x2d.astype(compute_dtype)
        weight = weight.astype(compute_dtype)

    # --- tile selection (VMEM-budgeted) --------------------------------------
    # N and K tiles always divide their dims exactly (or span them), so only M
    # may be ragged; Pallas masks the partial last M block (no jnp.pad needed).
    tn = _pick_tile(d_out, tn, 128)
    tk = _pick_tile(d_in, tk, 128)
    if m <= tm:
        tm = m                          # single row-tile spanning the full M
    else:
        tm = max(8, (tm // 8) * 8)      # second-to-last dim must be 8-aligned

    gm = pl.cdiv(m, tm)
    gn = d_out // tn
    gk = d_in // tk

    common = dict(
        out_shape=jax.ShapeDtypeStruct((m, d_out), out_dtype),
        compiler_params=pltpu.CompilerParams(
            dimension_semantics=(("parallel", "parallel")
                                 if gk == 1 else
                                 ("parallel", "parallel", "arbitrary")),
            vmem_limit_bytes=vmem_limit_bytes,
        ),
    )

    if gk == 1:
        # Whole K fits in one block: no accumulator scratch, direct store.
        out2d = pl.pallas_call(
            _linear_kernel_single_k,
            grid_spec=pltpu.PrefetchScalarGridSpec(
                num_scalar_prefetch=0,
                grid=(gm, gn),
                in_specs=[
                    pl.BlockSpec((tm, tk), lambda i, j: (i, 0)),   # x
                    pl.BlockSpec((tn, tk), lambda i, j: (j, 0)),   # weight
                    pl.BlockSpec((1, tn), lambda i, j: (0, j)),    # bias
                ],
                out_specs=pl.BlockSpec((tm, tn), lambda i, j: (i, j)),
            ),
            **common,
        )(x2d, weight, b2d)
    else:
        out2d = pl.pallas_call(
            _linear_kernel_multi_k,
            grid_spec=pltpu.PrefetchScalarGridSpec(
                num_scalar_prefetch=0,
                grid=(gm, gn, gk),
                in_specs=[
                    pl.BlockSpec((tm, tk), lambda i, j, k: (i, k)),   # x
                    pl.BlockSpec((tn, tk), lambda i, j, k: (j, k)),   # weight
                    pl.BlockSpec((1, tn), lambda i, j, k: (0, j)),    # bias
                ],
                out_specs=pl.BlockSpec((tm, tn), lambda i, j, k: (i, j)),
                scratch_shapes=[pltpu.VMEM((tm, tn), jnp.float32)],
            ),
            **common,
        )(x2d, weight, b2d)

    return out2d.reshape(*orig_shape[:-1], d_out)


def make_linear_projector_params(d_in, d_out, key):
    """Matches LinearProjector.__init__: weight <- eye_, bias <- nn.Linear's
    default uniform init (drawn deterministically from `key` here)."""
    weight = jnp.eye(d_out, d_in, dtype=jnp.float32)        # nn.init.eye_
    bound = 1.0 / (d_in ** 0.5)
    bias = jax.random.uniform(key, (d_out,), jnp.float32, -bound, bound)
    return weight, bias


if __name__ == "__main__":
    key = jax.random.PRNGKey(0)
    k_x, k_b = jax.random.split(key)

    batch, seq, d_in, d_out = 2, 8, 32, 32
    x = jax.random.normal(k_x, (batch, seq, d_in), dtype=jnp.float32)

    weight, bias = make_linear_projector_params(d_in, d_out, k_b)

    run = jax.jit(functools.partial(linear_projector))
    y = run(x, weight, bias)
    y = jax.block_until_ready(y)

    # reference check (plain JAX)
    y_ref = x @ weight.T + bias
    assert y.shape == (batch, seq, d_out)
    assert jnp.allclose(y, y_ref, atol=1e-5, rtol=1e-5)

    # also exercise the ragged-M tiled path (M > tm, not a multiple of tm)
    x2 = jax.random.normal(k_x, (3, 700, d_in), dtype=jnp.float32)
    y2 = jax.block_until_ready(linear_projector(x2, weight, bias, tm=512))
    y2_ref = x2 @ weight.T + bias
    assert y2.shape == (3, 700, d_out)
    assert jnp.allclose(y2, y2_ref, atol=1e-5, rtol=1e-5)

    # multi-K-block path (K tiled) at a modest size, bf16 compute
    d_big = 256
    w_big = jnp.eye(d_big, d_big, dtype=jnp.float32)
    b_big = jax.random.uniform(k_b, (d_big,), jnp.float32, -0.05, 0.05)
    x3 = jax.random.normal(k_x, (4, 64, d_big), dtype=jnp.float32)
    y3 = jax.block_until_ready(
        linear_projector(x3, w_big, b_big, tk=128, tn=128, tm=128))
    y3_ref = x3 @ w_big.T + b_big
    assert jnp.allclose(y3, y3_ref, atol=1e-5, rtol=1e-5)

    print("KERNEL_OK")
</pallas_src>

<mosaic_0001>
module attributes {stable_mosaic.version = 11 : i64} {
  func.func @_linear_kernel_single_k(%arg0: i32, %arg1: i32, %arg2: memref<16x32xf32, #tpu.memory_space<vmem>>, %arg3: memref<32x32xf32, #tpu.memory_space<vmem>>, %arg4: memref<1x32xf32, #tpu.memory_space<vmem>>, %arg5: memref<16x32xf32, #tpu.memory_space<vmem>>) attributes {dimension_semantics = [#tpu.dimension_semantics<parallel>, #tpu.dimension_semantics<parallel>], iteration_bounds = array<i64: 1, 1>, scalar_prefetch = 0 : i64, scratch_operands = 0 : i64, tpu.core_type = #tpu.core_type<tc>, window_params = [{transform_indices = @transform_0, window_bounds = array<i64: 16, 32>}, {transform_indices = @transform_1, window_bounds = array<i64: 32, 32>}, {transform_indices = @transform_2, window_bounds = array<i64: 1, 32>}, {transform_indices = @transform_3, window_bounds = array<i64: 16, 32>}]} {
    %c0 = arith.constant 0 : index
    %c0_0 = arith.constant 0 : index
    %0 = vector.load %arg2[%c0, %c0_0] : memref<16x32xf32, #tpu.memory_space<vmem>>, vector<16x32xf32>
    %c0_1 = arith.constant 0 : index
    %c0_2 = arith.constant 0 : index
    %1 = vector.load %arg3[%c0_1, %c0_2] : memref<32x32xf32, #tpu.memory_space<vmem>>, vector<32x32xf32>
    %cst = arith.constant dense<0.000000e+00> : vector<16x32xf32>
    %2 = tpu.matmul %0, %1, %cst {dimension_numbers = #tpu.dot_dimension_numbers<[1], [1], [0], [0], [0, 0, 1, 0], [], []>} : vector<16x32xf32>, vector<32x32xf32>, vector<16x32xf32> -> vector<16x32xf32>
    %c0_3 = arith.constant 0 : index
    %c0_4 = arith.constant 0 : index
    %3 = vector.load %arg4[%c0_3, %c0_4] : memref<1x32xf32, #tpu.memory_space<vmem>>, vector<1x32xf32>
    %4 = vector.broadcast %3 : vector<1x32xf32> to vector<16x32xf32>
    %5 = arith.addf %2, %4 : vector<16x32xf32>
    %c0_5 = arith.constant 0 : index
    %c0_6 = arith.constant 0 : index
    %6 = vector.load %arg5[%c0_5, %c0_6] : memref<16x32xf32, #tpu.memory_space<vmem>>, vector<16x32xf32>
    tpu.vector_store %arg5[%c0_5, %c0_6], %5 {strides = array<i32>} : memref<16x32xf32, #tpu.memory_space<vmem>>, vector<16x32xf32>,
    return
  }
  func.func @transform_0(%arg0: i32, %arg1: i32) -> (i32, i32) {
    %c0_i32 = arith.constant 0 : i32
    %c0_i32_0 = arith.constant 0 : i32
    return %arg0, %c0_i32 : i32, i32
  }
  func.func @transform_1(%arg0: i32, %arg1: i32) -> (i32, i32) {
    %c0_i32 = arith.constant 0 : i32
    %c0_i32_0 = arith.constant 0 : i32
    return %arg1, %c0_i32 : i32, i32
  }
  func.func @transform_2(%arg0: i32, %arg1: i32) -> (i32, i32) {
    %c0_i32 = arith.constant 0 : i32
    %c0_i32_0 = arith.constant 0 : i32
    return %c0_i32, %arg1 : i32, i32
  }
  func.func @transform_3(%arg0: i32, %arg1: i32) -> (i32, i32) {
    %c0_i32 = arith.constant 0 : i32
    return %arg0, %arg1 : i32, i32
  }
}

</mosaic_0001>

<llo_original>
// kernel: linear_projector.1
$region0: #{linear_projector.1}
  #allocation0 [shape = 'u32[]', space=smem, size = 0x4, offset = 0x4, fixed_abs, tag = 'smem constant byte address 0x4 - core index']
  #allocation1 [shape = 'u32[144,128]{1,0:T(1,128)}', space=vmem, size = 0x12000, scoped, tag = 'internal scratch']
  %s0 = inlined_call_operand.hbm [shape: f32[16,32], index: 0, kind: input, shape index: {}]
  %s1 = inlined_call_operand.hbm [shape: f32[32,32], index: 1, kind: input, shape index: {}]
  %s2 = inlined_call_operand.vmem [shape: f32[1,32], index: 2, kind: input, shape index: {}]
  %s3 = inlined_call_operand.hbm [shape: f32[16,32], index: 3, kind: output, shape index: {}]
  %s4 = sld [smem:[#allocation0]]
  $region30: #{linear_projector.1} parent=0
    _
  %s6 = ssub.s32 1, %s4
  %s7 = scalar_select 0, %s6, %s4
  $region1: #{linear_projector.1} parent=0
    #allocation2 [shape = 'u8[8192]{0}', space=vmem, size = 0x2000, scoped, tag = 'input window, operand 0, single buffered']
    #allocation3 [shape = 's32[1]{0}', space=sflag, size = 0x4, scoped, tag = 'scoped memory for linear_projector.1']
    #allocation4 [shape = 's32[1]{0}', space=sflag, size = 0x4, scoped, tag = 'scoped memory for linear_projector.1']
    #allocation5 [shape = 'u8[16384]{0}', space=vmem, size = 0x4000, scoped, tag = 'input window, operand 1, single buffered']
    #allocation6 [shape = 's32[1]{0}', space=sflag, size = 0x4, scoped, tag = 'scoped memory for linear_projector.1']
    #allocation7 [shape = 'u8[8192]{0}', space=vmem, size = 0x2000, scoped, tag = 'output window, operand 0, single buffered']
    %8 = vsyncpa [#allocation3], 0
    %9 = vsyncpa [#allocation6], 0
    %10 = vsyncpa [#allocation4], 0
    // Predicated region
    $region2: #{linear_projector.1} parent=1 // pred_check
      _
    $region3: #{linear_projector.1} parent=1 // pred_check_branch
      %12 = sbr.rel (0) target = $region5
    $region4: #{linear_projector.1} parent=1 // pred_region
      %s14 = ssub.s32 256, 256
      %15 = vsyncadd [#allocation3], %s14
      %s16 = sshll.u32 [#allocation2], 4
      %s17 = int_to_ptr.vmem [resolvable:$true] %s16
      %22 = dma.hbm_to_vmem [thread:$0]  %s0, 256, %s17, [#allocation3], 128, 128, 8
    $region5: #{linear_projector.1} parent=1 // pred_fallthru
      _
    // Predicated region
    $region6: #{linear_projector.1} parent=1 // pred_check
      _
    $region7: #{linear_projector.1} parent=1 // pred_check_branch
      %24 = sbr.rel (0) target = $region9
    $region8: #{linear_projector.1} parent=1 // pred_region
      %s26 = ssub.s32 512, 512
      %27 = vsyncadd [#allocation6], %s26
      %s28 = sshll.u32 [#allocation5], 4
      %s29 = int_to_ptr.vmem [resolvable:$true] %s28
      %34 = dma.hbm_to_vmem [thread:$0]  %s1, 512, %s29, [#allocation6], 128, 128, 8
    $region9: #{linear_projector.1} parent=1 // pred_fallthru
      _
    // Predicated region
    $region10: #{linear_projector.1} parent=1 // pred_check
      _
    $region11: #{linear_projector.1} parent=1 // pred_check_branch
      %36 = sbr.rel (0) target = $region13
    $region12: #{linear_projector.1} parent=1 // pred_region
      _
    $region13: #{linear_projector.1} parent=1 // pred_fallthru
      _
    // Predicated region
    $region14: #{linear_projector.1} parent=1 // pred_check
      _
    $region15: #{linear_projector.1} parent=1 // pred_check_branch
      %38 = sbr.rel (0) target = $region17
    $region16: #{linear_projector.1} parent=1 // pred_region
      %39 = dma.done [#allocation3], 256
    $region17: #{linear_projector.1} parent=1 // pred_fallthru
      _
    // Predicated region
    $region18: #{linear_projector.1} parent=1 // pred_check
      _
    $region19: #{linear_projector.1} parent=1 // pred_check_branch
      %41 = sbr.rel (0) target = $region21
    $region20: #{linear_projector.1} parent=1 // pred_region
      %42 = dma.done [#allocation6], 512
    $region21: #{linear_projector.1} parent=1 // pred_fallthru
      _
    %v43 = vld [vmem:[#allocation2] sm:$0xff]
    %v44 = vld [vmem:[#allocation2 + $0x8] sm:$0xff]
    %v45 = vld [vmem:[#allocation5] sm:$0xff]
    %v46 = vld [vmem:[#allocation5 + $0x8] sm:$0xff]
    %v47 = vld [vmem:[#allocation5 + $0x10] sm:$0xff]
    %v48 = vld [vmem:[#allocation5 + $0x18] sm:$0xff]
    %v49 = vld [vmem:[%s2] sm:$0x1]
    %v51 = vlaneseq
    %v52 = vshrl.u32 %v51, 7
    %v53 = vsub.s32 0, %v52
    %v54 = vrot.slane %v49, %v53
    %vm56 = vcmask 261120
    %v58 = vsel %vm56, %v43, 0
    %v61 = vsel %vm56, %v44, 0
    %v64 = vsel %vm56, %v45, 0
    %v67 = vsel %vm56, %v46, 0
    %v70 = vsel %vm56, %v47, 0
    %v73 = vsel %vm56, %v48, 0
    %75 = vmatprep.subr.mxu0 0.0
    %76 = vmatpush1.xpose.msra.mxu0 %v64
    %77 = vmatprep.subr.mxu0 0.0
    %78 = vmatpush1.xpose.msra.mxu0 %v67
    %79 = vmatprep.subr.mxu0 0.0
    %80 = vmatpush1.xpose.msra.mxu0 %v70
    %81 = vmatprep.subr.mxu0 0.0
    %82 = vmatpush1.xpose.msra.mxu0 %v73
    %83 = vmatprep.subr.mxu0 0.0
    %84 = vmatpush1.xpose.msra.mxu0 0.0
    %85 = vmatprep.subr.mxu0 0.0
    %86 = vmatpush1.xpose.msra.mxu0 0.0
    %87 = vmatprep.subr.mxu0 0.0
    %88 = vmatpush1.xpose.msra.mxu0 0.0
    %89 = vmatprep.subr.mxu0 0.0
    %90 = vmatpush1.xpose.msra.mxu0 0.0
    %91 = vmatprep.subr.mxu0 0.0
    %92 = vmatpush1.xpose.msra.mxu0 0.0
    %93 = vmatprep.subr.mxu0 0.0
    %94 = vmatpush1.xpose.msra.mxu0 0.0
    %95 = vmatprep.subr.mxu0 0.0
    %96 = vmatpush1.xpose.msra.mxu0 0.0
    %97 = vmatprep.subr.mxu0 0.0
    %98 = vmatpush1.xpose.msra.mxu0 0.0
    %99 = vmatprep.subr.mxu0 0.0
    %100 = vmatpush1.xpose.msra.mxu0 0.0
    %101 = vmatprep.subr.mxu0 0.0
    %102 = vmatpush1.xpose.msra.mxu0 0.0
    %103 = vmatprep.subr.mxu0 0.0
    %104 = vmatpush1.xpose.msra.mxu0 0.0
    %105 = vmatprep.subr.mxu0 0.0
    %106 = vmatpush1.xpose.msra.mxu0 0.0
    %107 = vmatprep.subr.mxu0 0.0
    %108 = vmatpush1.xpose.msra.mxu0 0.0
    %109 = vmatprep.subr.mxu0 0.0
    %110 = vmatpush1.xpose.msra.mxu0 0.0
    %111 = vmatprep.subr.mxu0 0.0
    %112 = vmatpush1.xpose.msra.mxu0 0.0
    %113 = vmatprep.subr.mxu0 0.0
    %114 = vmatpush1.xpose.msra.mxu0 0.0
    %115 = vmatprep.subr.mxu0 0.0
    %116 = vmatpush1.xpose.msra.mxu0 0.0
    %117 = vmatprep.subr.mxu0 0.0
    %118 = vmatpush1.xpose.msra.mxu0 0.0
    %119 = vmatprep.subr.mxu0 0.0
    %120 = vmatpush1.xpose.msra.mxu0 0.0
    %121 = vmatprep.subr.mxu0 0.0
    %122 = vmatpush1.xpose.msra.mxu0 0.0
    %123 = vmatprep.subr.mxu0 0.0
    %124 = vmatpush1.xpose.msra.mxu0 0.0
    %125 = vmatprep.subr.mxu0 0.0
    %126 = vmatpush1.xpose.msra.mxu0 0.0
    %127 = vmatprep.subr.mxu0 0.0
    %128 = vmatpush1.xpose.msra.mxu0 0.0
    %129 = vmatprep.subr.mxu0 0.0
    %130 = vmatpush1.xpose.msra.mxu0 0.0
    %131 = vmatprep.subr.mxu0 0.0
    %132 = vmatpush1.xpose.msra.mxu0 0.0
    %133 = vmatprep.subr.mxu0 0.0
    %134 = vmatpush1.xpose.msra.mxu0 0.0
    %135 = vmatprep.subr.mxu0 0.0
    %136 = vmatpush1.xpose.msra.mxu0 0.0
    %137 = vmatprep.subr.mxu0 0.0
    %138 = vmatpush1.xpose.msra.mxu0 0.0
    %139 = vmatprep.mubr.f32.mxu0 0.0
    %140 = vmatmul.mubr.f32.gmra.mrb[0].mxu0 %v58
    %v141 = vpop.f32.mrb[0].mxu0
    %v142 = vadd.f32 %v54, %v141
    %v143 = vpop.f32.mrb[0].mxu0
    %144 = vmatprep.mubr.f32.mxu0 0.0
    %145 = vmatmul.mubr.f32.gmra.mrb[0].mxu0 %v61
    %v146 = vpop.f32.mrb[0].mxu0
    %v147 = vadd.f32 %v54, %v146
    %v148 = vpop.f32.mrb[0].mxu0
    %149 = vdwg.mxu0
    %150 = vst.msk [vmem:[#allocation7] sm:$0xff] %vm56, %v142
    %151 = vst.msk [vmem:[#allocation7 + $0x8] sm:$0xff] %vm56, %v147
    // Predicated region
    $region22: #{linear_projector.1} parent=1 // pred_check
      _
    $region23: #{linear_projector.1} parent=1 // pred_check_branch
      %153 = sbr.rel (0) target = $region25
    $region24: #{linear_projector.1} parent=1 // pred_region
      %s155 = ssub.s32 256, 256
      %156 = vsyncadd [#allocation4], %s155
      %s157 = sshll.u32 [#allocation7], 4
      %s158 = int_to_ptr.vmem [resolvable:$true] %s157
      %163 = dma.vmem_to_hbm [thread:$0]  %s158, 256, %s3, [#allocation4], 128, 128, 8
    $region25: #{linear_projector.1} parent=1 // pred_fallthru
      _
    // Predicated region
    $region26: #{linear_projector.1} parent=1 // pred_check
      _
    $region27: #{linear_projector.1} parent=1 // pred_check_branch
      %165 = sbr.rel (0) target = $region29
    $region28: #{linear_projector.1} parent=1 // pred_region
      %166 = dma.done [#allocation4], 256
    $region29: #{linear_projector.1} parent=1 // pred_fallthru
      _
    %167 = vsyncpa [#allocation3], 1
    %168 = vsyncpa [#allocation6], 1
    %169 = vsyncpa [#allocation4], 1

</llo_original>
